<compile_context>
chip_gen: v5e
topology: v5e:2x2
jax: 0.10.0
libtpu: 0.0.40
codegen_flags: <defaults>
</compile_context>

<pallas_src>
import jax
import jax.numpy as jnp
from jax.experimental import pallas as pl
from jax.experimental.pallas import tpu as pltpu

Z_dim = 100
h_dim = 128
X_dim = 28 * 28          # 784

# Lane-aligned (padded) sizes used inside the kernel.
Z_pad = 128              # 100 -> 128 (zero-padded contraction dim)
X_pad = 896              # 784 -> 896 = 7 * 128 (lane-dense output stores)


def _round_up(x, m):
    return (x + m - 1) // m * m


def generator_kernel(x_ref, w1_ref, b1_ref, w2_ref, b2_ref, o_ref):
    """One batch tile.
    x_ref : (TB, Z_pad)    matmul dtype (f32 or bf16)
    w1_ref: (Z_pad, h_dim) matmul dtype
    b1_ref: (1, h_dim)     f32
    w2_ref: (h_dim, X_pad) matmul dtype
    b2_ref: (1, X_pad)     f32
    o_ref : (TB, X_pad)    output dtype
    """
    x = x_ref[...]
    # Layer 1: MXU matmul (f32 accumulate) + f32 bias + ReLU on the VPU.
    h = jnp.dot(x, w1_ref[...], preferred_element_type=jnp.float32) + b1_ref[...]
    h = jnp.maximum(h, 0.0)
    # Layer 2: feed the MXU in the weight dtype, accumulate in f32.
    logits = jnp.dot(h.astype(w2_ref.dtype), w2_ref[...],
                     preferred_element_type=jnp.float32) + b2_ref[...]
    # Exact sigmoid: 1 / (1 + exp(-x)).  exp goes to the EUP; the divide uses
    # the full-precision (Newton-refined) reciprocal, so accuracy matches the
    # reference to float rounding.
    out = 1.0 / (1.0 + jnp.exp(-logits))
    o_ref[...] = out.astype(o_ref.dtype)


def generator_forward(inp, w1, b1, w2, b2, *, tile_b=1024, use_bf16=True,
                      out_dtype=None):
    """inp: (B, Z_dim) f32; w1: (Z_dim, h_dim); b1: (1, h_dim);
    w2: (h_dim, X_dim); b2: (1, X_dim). Returns (B, X_dim)."""
    B = inp.shape[0]
    assert inp.shape[1] == Z_dim
    assert tile_b % 8 == 0

    mm_dtype = jnp.bfloat16 if use_bf16 else jnp.float32
    if out_dtype is None:
        out_dtype = jnp.bfloat16 if use_bf16 else jnp.float32

    # --- batch tiling: tile must be a multiple of 8 sublanes; pad B up so the
    # grid divides evenly (partial rows are zero and sliced off afterwards). ---
    tb = min(tile_b, _round_up(B, 8))
    B_pad = _round_up(B, tb)
    n_blocks = B_pad // tb

    # --- zero-pad to lane-aligned shapes (zeros contribute 0 to the dots). ---
    x_p = jnp.zeros((B_pad, Z_pad), mm_dtype).at[:B, :Z_dim].set(
        inp.astype(mm_dtype))
    w1_p = jnp.zeros((Z_pad, h_dim), mm_dtype).at[:Z_dim, :].set(
        w1.astype(mm_dtype))
    b1_p = b1.astype(jnp.float32)                                   # (1, h_dim)
    w2_p = jnp.zeros((h_dim, X_pad), mm_dtype).at[:, :X_dim].set(
        w2.astype(mm_dtype))
    b2_p = jnp.zeros((1, X_pad), jnp.float32).at[:, :X_dim].set(
        b2.astype(jnp.float32))

    itemsize = jnp.dtype(mm_dtype).itemsize
    cost = pl.CostEstimate(
        flops=2 * B_pad * (Z_pad * h_dim + h_dim * X_pad),
        transcendentals=B_pad * X_pad,
        bytes_accessed=(B_pad * Z_pad * itemsize            # x in
                        + (Z_pad * h_dim + h_dim * X_pad) * itemsize  # weights
                        + (h_dim + X_pad) * 4               # biases (f32)
                        + B_pad * X_pad * jnp.dtype(out_dtype).itemsize))

    out_padded = pl.pallas_call(
        generator_kernel,
        out_shape=jax.ShapeDtypeStruct((B_pad, X_pad), out_dtype),
        grid=(n_blocks,),
        in_specs=[
            pl.BlockSpec((tb, Z_pad), lambda i: (i, 0)),      # x: tiled on batch
            pl.BlockSpec((Z_pad, h_dim), lambda i: (0, 0)),   # w1: VMEM-resident
            pl.BlockSpec((1, h_dim), lambda i: (0, 0)),       # b1
            pl.BlockSpec((h_dim, X_pad), lambda i: (0, 0)),   # w2
            pl.BlockSpec((1, X_pad), lambda i: (0, 0)),       # b2
        ],
        out_specs=pl.BlockSpec((tb, X_pad), lambda i: (i, 0)),
        compiler_params=pltpu.CompilerParams(
            dimension_semantics=("parallel",)),               # megacore on v7x
        cost_estimate=cost,
    )(x_p, w1_p, b1_p, w2_p, b2_p)

    # Strip batch/lane padding.
    return out_padded[:B, :X_dim]


def init_params(key):
    """Deterministic init matching nn.Linear shapes (U(-1/sqrt(fan_in), ...));
    weights pre-transposed to (in, out)."""
    k1, k2, k3, k4 = jax.random.split(key, 4)
    lim1 = 1.0 / jnp.sqrt(Z_dim)
    lim2 = 1.0 / jnp.sqrt(h_dim)
    w1 = jax.random.uniform(k1, (Z_dim, h_dim), jnp.float32, -lim1, lim1)
    b1 = jax.random.uniform(k2, (1, h_dim), jnp.float32, -lim1, lim1)
    w2 = jax.random.uniform(k3, (h_dim, X_dim), jnp.float32, -lim2, lim2)
    b2 = jax.random.uniform(k4, (1, X_dim), jnp.float32, -lim2, lim2)
    return w1, b1, w2, b2


if __name__ == "__main__":
    key = jax.random.PRNGKey(0)
    kp, kx = jax.random.split(key)
    w1, b1, w2, b2 = init_params(kp)

    B = 8
    z = jax.random.normal(kx, (B, Z_dim), jnp.float32)

    # Plain-JAX reference (same math as the PyTorch module).
    ref = jax.nn.sigmoid(jnp.maximum(z @ w1 + b1, 0.0) @ w2 + b2)

    # f32 path (exact sigmoid; tolerance covers MXU f32 rounding).
    out_f32 = jax.block_until_ready(
        generator_forward(z, w1, b1, w2, b2, use_bf16=False))
    assert out_f32.shape == (B, X_dim)
    assert out_f32.dtype == jnp.float32
    assert jnp.allclose(out_f32, ref, atol=2e-3, rtol=2e-3), (
        float(jnp.max(jnp.abs(out_f32 - ref))))

    # bf16 fast path (halved HBM bytes; relaxed tolerance).
    out_bf16 = jax.block_until_ready(
        generator_forward(z, w1, b1, w2, b2, use_bf16=True))
    assert out_bf16.shape == (B, X_dim)
    assert jnp.allclose(out_bf16.astype(jnp.float32), ref, atol=3e-2, rtol=3e-2), (
        float(jnp.max(jnp.abs(out_bf16.astype(jnp.float32) - ref))))

    print("KERNEL_OK")
</pallas_src>

<mosaic_0001>
module attributes {stable_mosaic.version = 11 : i64} {
  func.func @generator_kernel(%arg0: i32, %arg1: memref<8x128xf32, #tpu.memory_space<vmem>>, %arg2: memref<128x128xf32, #tpu.memory_space<vmem>>, %arg3: memref<1x128xf32, #tpu.memory_space<vmem>>, %arg4: memref<128x896xf32, #tpu.memory_space<vmem>>, %arg5: memref<1x896xf32, #tpu.memory_space<vmem>>, %arg6: memref<8x896xf32, #tpu.memory_space<vmem>>) attributes {dimension_semantics = [#tpu.dimension_semantics<parallel>], iteration_bounds = array<i64: 1>, scalar_prefetch = 0 : i64, scratch_operands = 0 : i64, tpu.core_type = #tpu.core_type<tc>, window_params = [{transform_indices = @transform_0, window_bounds = array<i64: 8, 128>}, {pipeline_mode = #tpu.pipeline_mode<synchronous>, transform_indices = @transform_1, window_bounds = array<i64: 128, 128>}, {pipeline_mode = #tpu.pipeline_mode<synchronous>, transform_indices = @transform_2, window_bounds = array<i64: 1, 128>}, {pipeline_mode = #tpu.pipeline_mode<synchronous>, transform_indices = @transform_3, window_bounds = array<i64: 128, 896>}, {pipeline_mode = #tpu.pipeline_mode<synchronous>, transform_indices = @transform_4, window_bounds = array<i64: 1, 896>}, {transform_indices = @transform_5, window_bounds = array<i64: 8, 896>}]} {
    %c0 = arith.constant 0 : index
    %c0_0 = arith.constant 0 : index
    %0 = vector.load %arg1[%c0, %c0_0] : memref<8x128xf32, #tpu.memory_space<vmem>>, vector<8x128xf32>
    %c0_1 = arith.constant 0 : index
    %c0_2 = arith.constant 0 : index
    %1 = vector.load %arg2[%c0_1, %c0_2] : memref<128x128xf32, #tpu.memory_space<vmem>>, vector<128x128xf32>
    %cst = arith.constant dense<0.000000e+00> : vector<8x128xf32>
    %2 = tpu.matmul %0, %1, %cst {dimension_numbers = #tpu.dot_dimension_numbers<[1], [0], [0], [1], [0, 0, 1, 1], [], []>} : vector<8x128xf32>, vector<128x128xf32>, vector<8x128xf32> -> vector<8x128xf32>
    %c0_3 = arith.constant 0 : index
    %c0_4 = arith.constant 0 : index
    %3 = vector.load %arg3[%c0_3, %c0_4] : memref<1x128xf32, #tpu.memory_space<vmem>>, vector<1x128xf32>
    %4 = vector.broadcast %3 : vector<1x128xf32> to vector<8x128xf32>
    %5 = arith.addf %2, %4 : vector<8x128xf32>
    %cst_5 = arith.constant 0.000000e+00 : f32
    %6 = vector.broadcast %cst_5 : f32 to vector<8x128xf32>
    %7 = arith.maximumf %5, %6 : vector<8x128xf32>
    %c0_6 = arith.constant 0 : index
    %c0_7 = arith.constant 0 : index
    %8 = vector.load %arg4[%c0_6, %c0_7] : memref<128x896xf32, #tpu.memory_space<vmem>>, vector<128x896xf32>
    %cst_8 = arith.constant dense<0.000000e+00> : vector<8x896xf32>
    %9 = tpu.matmul %7, %8, %cst_8 {dimension_numbers = #tpu.dot_dimension_numbers<[1], [0], [0], [1], [0, 0, 1, 1], [], []>} : vector<8x128xf32>, vector<128x896xf32>, vector<8x896xf32> -> vector<8x896xf32>
    %c0_9 = arith.constant 0 : index
    %c0_10 = arith.constant 0 : index
    %10 = vector.load %arg5[%c0_9, %c0_10] : memref<1x896xf32, #tpu.memory_space<vmem>>, vector<1x896xf32>
    %11 = vector.broadcast %10 : vector<1x896xf32> to vector<8x896xf32>
    %12 = arith.addf %9, %11 : vector<8x896xf32>
    %cst_11 = arith.constant 0.000000e+00 : f32
    %13 = vector.broadcast %cst_11 : f32 to vector<8x896xf32>
    %14 = arith.subf %13, %12 : vector<8x896xf32>
    %15 = math.exp %14 : vector<8x896xf32>
    %cst_12 = arith.constant 1.000000e+00 : f32
    %16 = vector.broadcast %cst_12 : f32 to vector<8x896xf32>
    %17 = arith.addf %16, %15 : vector<8x896xf32>
    %cst_13 = arith.constant 1.000000e+00 : f32
    %18 = vector.broadcast %cst_13 : f32 to vector<8x896xf32>
    %19 = arith.divf %18, %17 : vector<8x896xf32>
    %c0_14 = arith.constant 0 : index
    %c0_15 = arith.constant 0 : index
    %20 = vector.load %arg6[%c0_14, %c0_15] : memref<8x896xf32, #tpu.memory_space<vmem>>, vector<8x896xf32>
    tpu.vector_store %arg6[%c0_14, %c0_15], %19 {strides = array<i32>} : memref<8x896xf32, #tpu.memory_space<vmem>>, vector<8x896xf32>,
    return
  }
  func.func @transform_0(%arg0: i32) -> (i32, i32) {
    %c0_i32 = arith.constant 0 : i32
    %c0_i32_0 = arith.constant 0 : i32
    return %arg0, %c0_i32 : i32, i32
  }
  func.func @transform_1(%arg0: i32) -> (i32, i32) {
    %c0_i32 = arith.constant 0 : i32
    %c0_i32_0 = arith.constant 0 : i32
    %c0_i32_1 = arith.constant 0 : i32
    return %c0_i32, %c0_i32_0 : i32, i32
  }
  func.func @transform_2(%arg0: i32) -> (i32, i32) {
    %c0_i32 = arith.constant 0 : i32
    %c0_i32_0 = arith.constant 0 : i32
    %c0_i32_1 = arith.constant 0 : i32
    return %c0_i32, %c0_i32_0 : i32, i32
  }
  func.func @transform_3(%arg0: i32) -> (i32, i32) {
    %c0_i32 = arith.constant 0 : i32
    %c0_i32_0 = arith.constant 0 : i32
    %c0_i32_1 = arith.constant 0 : i32
    return %c0_i32, %c0_i32_0 : i32, i32
  }
  func.func @transform_4(%arg0: i32) -> (i32, i32) {
    %c0_i32 = arith.constant 0 : i32
    %c0_i32_0 = arith.constant 0 : i32
    %c0_i32_1 = arith.constant 0 : i32
    return %c0_i32, %c0_i32_0 : i32, i32
  }
  func.func @transform_5(%arg0: i32) -> (i32, i32) {
    %c0_i32 = arith.constant 0 : i32
    %c0_i32_0 = arith.constant 0 : i32
    return %arg0, %c0_i32 : i32, i32
  }
}

</mosaic_0001>

<llo_original>
// kernel: tpu_custom_call.1
$region0: #{tpu_custom_call.1}
  #allocation0 [shape = 'u32[]', space=smem, size = 0x4, offset = 0x4, fixed_abs, tag = 'smem constant byte address 0x4 - core index']
  #allocation1 [shape = 'u32[72,128]{1,0:T(1,128)}', space=vmem, size = 0x9000, scoped, tag = 'internal scratch']
  %s0 = inlined_call_operand.hbm [shape: f32[8,128], index: 0, kind: input, shape index: {}]
  %s1 = inlined_call_operand.hbm [shape: f32[128,128], index: 1, kind: input, shape index: {}]
  %s2 = inlined_call_operand.vmem [shape: f32[1,128], index: 2, kind: input, shape index: {}]
  %s3 = inlined_call_operand.hbm [shape: f32[128,896], index: 3, kind: input, shape index: {}]
  %s4 = inlined_call_operand.hbm [shape: f32[1,896], index: 4, kind: input, shape index: {}]
  %s5 = inlined_call_operand.hbm [shape: f32[8,896], index: 5, kind: output, shape index: {}]
  %s6 = sld [smem:[#allocation0]]
  $region46: #{tpu_custom_call.1} parent=0
    _
  %s8 = ssub.s32 1, %s6
  %s9 = scalar_select 0, %s8, %s6
  $region1: #{tpu_custom_call.1} parent=0
    #allocation2 [shape = 'u8[4096]{0}', space=vmem, size = 0x1000, scoped, tag = 'input window, operand 0, single buffered']
    #allocation3 [shape = 's32[1]{0}', space=sflag, size = 0x4, scoped, tag = 'scoped memory for tpu_custom_call.1']
    #allocation4 [shape = 's32[1]{0}', space=sflag, size = 0x4, scoped, tag = 'scoped memory for tpu_custom_call.1']
    #allocation5 [shape = 'u8[65536]{0}', space=vmem, size = 0x10000, scoped, tag = 'input window, operand 1, single buffered']
    #allocation6 [shape = 's32[1]{0}', space=sflag, size = 0x4, scoped, tag = 'scoped memory for tpu_custom_call.1']
    #allocation7 [shape = 'u8[458752]{0}', space=vmem, size = 0x70000, scoped, tag = 'input window, operand 3, single buffered']
    #allocation8 [shape = 'u8[3584]{0}', space=vmem, size = 0x1000, scoped, tag = 'input window, operand 4, single buffered']
    #allocation9 [shape = 's32[1]{0}', space=sflag, size = 0x4, scoped, tag = 'scoped memory for tpu_custom_call.1']
    #allocation10 [shape = 'u8[28672]{0}', space=vmem, size = 0x7000, scoped, tag = 'output window, operand 0, single buffered']
    %10 = vsyncpa [#allocation3], 0
    %11 = vsyncpa [#allocation6], 0
    %12 = vsyncpa [#allocation9], 0
    %13 = vsyncpa [#allocation4], 0
    // Predicated region
    $region2: #{tpu_custom_call.1} parent=1 // pred_check
      _
    $region3: #{tpu_custom_call.1} parent=1 // pred_check_branch
      %15 = sbr.rel (0) target = $region5
    $region4: #{tpu_custom_call.1} parent=1 // pred_region
      %17 = vsyncadd [#allocation3], 0
      %s19 = sshll.u32 %s0, 4
      %s20 = int_to_ptr.hbm [resolvable:$true] %s19
      %s21 = sshll.u32 [#allocation2], 4
      %s22 = int_to_ptr.vmem [resolvable:$true] %s21
      %24 = dma.hbm_to_vmem [thread:$0]  %s20, 128, %s22, [#allocation3]
    $region5: #{tpu_custom_call.1} parent=1 // pred_fallthru
      _
    // Predicated region
    $region6: #{tpu_custom_call.1} parent=1 // pred_check
      _
    $region7: #{tpu_custom_call.1} parent=1 // pred_check_branch
      %26 = sbr.rel (0) target = $region9
    $region8: #{tpu_custom_call.1} parent=1 // pred_region
      %28 = vsyncadd [#allocation6], 0
      %s29 = sshll.u32 %s1, 4
      %s30 = int_to_ptr.hbm [resolvable:$true] %s29
      %s31 = sshll.u32 [#allocation5], 4
      %s32 = int_to_ptr.vmem [resolvable:$true] %s31
      %37 = dma.hbm_to_vmem [thread:$0]  %s30, 2048, %s32, [#allocation6], 128, 128, 8
    $region9: #{tpu_custom_call.1} parent=1 // pred_fallthru
      _
    // Predicated region
    $region10: #{tpu_custom_call.1} parent=1 // pred_check
      _
    $region11: #{tpu_custom_call.1} parent=1 // pred_check_branch
      %39 = sbr.rel (0) target = $region13
    $region12: #{tpu_custom_call.1} parent=1 // pred_region
      _
    $region13: #{tpu_custom_call.1} parent=1 // pred_fallthru
      _
    // Predicated region
    $region14: #{tpu_custom_call.1} parent=1 // pred_check
      _
    $region15: #{tpu_custom_call.1} parent=1 // pred_check_branch
      %41 = sbr.rel (0) target = $region17
    $region16: #{tpu_custom_call.1} parent=1 // pred_region
      %43 = vsyncadd [#allocation6], 0
      %s44 = sshll.u32 %s3, 4
      %s45 = int_to_ptr.hbm [resolvable:$true] %s44
      %s46 = sshll.u32 [#allocation7], 4
      %s47 = int_to_ptr.vmem [resolvable:$true] %s46
      %52 = dma.hbm_to_vmem [thread:$0]  %s45, 14336, %s47, [#allocation6], 896, 896, 56
    $region17: #{tpu_custom_call.1} parent=1 // pred_fallthru
      _
    // Predicated region
    $region18: #{tpu_custom_call.1} parent=1 // pred_check
      _
    $region19: #{tpu_custom_call.1} parent=1 // pred_check_branch
      %54 = sbr.rel (0) target = $region21
    $region20: #{tpu_custom_call.1} parent=1 // pred_region
      %56 = vsyncadd [#allocation9], 0
      %s58 = sshll.u32 %s4, 4
      %s59 = int_to_ptr.hbm [resolvable:$true] %s58
      %s60 = sshll.u32 [#allocation8], 4
      %s61 = int_to_ptr.vmem [resolvable:$true] %s60
      %63 = dma.hbm_to_vmem [thread:$0]  %s59, 112, %s61, [#allocation9]
    $region21: #{tpu_custom_call.1} parent=1 // pred_fallthru
      _
    // Predicated region
    $region22: #{tpu_custom_call.1} parent=1 // pred_check
      _
    $region23: #{tpu_custom_call.1} parent=1 // pred_check_branch
      %65 = sbr.rel (0) target = $region25
    $region24: #{tpu_custom_call.1} parent=1 // pred_region
      %67 = dma.done [#allocation3], 128
    $region25: #{tpu_custom_call.1} parent=1 // pred_fallthru
      _
    // Predicated region
    $region26: #{tpu_custom_call.1} parent=1 // pred_check
      _
    $region27: #{tpu_custom_call.1} parent=1 // pred_check_branch
      %69 = sbr.rel (0) target = $region29
    $region28: #{tpu_custom_call.1} parent=1 // pred_region
      %71 = dma.done [#allocation6], 2048
    $region29: #{tpu_custom_call.1} parent=1 // pred_fallthru
      _
    // Predicated region
    $region30: #{tpu_custom_call.1} parent=1 // pred_check
      _
    $region31: #{tpu_custom_call.1} parent=1 // pred_check_branch
      %73 = sbr.rel (0) target = $region33
    $region32: #{tpu_custom_call.1} parent=1 // pred_region
      %75 = dma.done [#allocation6], 14336
    $region33: #{tpu_custom_call.1} parent=1 // pred_fallthru
      _
    // Predicated region
    $region34: #{tpu_custom_call.1} parent=1 // pred_check
      _
    $region35: #{tpu_custom_call.1} parent=1 // pred_check_branch
      %77 = sbr.rel (0) target = $region37
    $region36: #{tpu_custom_call.1} parent=1 // pred_region
      %79 = dma.done [#allocation9], 112
    $region37: #{tpu_custom_call.1} parent=1 // pred_fallthru
      _
    %v80 = vld [vmem:[#allocation2] sm:$0xff]
    %v81 = vld [vmem:[#allocation5] sm:$0xff]
    %v82 = vld [vmem:[#allocation5 + $0x8] sm:$0xff]
    %v83 = vld [vmem:[#allocation5 + $0x10] sm:$0xff]
    %v84 = vld [vmem:[#allocation5 + $0x18] sm:$0xff]
    %v85 = vld [vmem:[#allocation5 + $0x20] sm:$0xff]
    %v86 = vld [vmem:[#allocation5 + $0x28] sm:$0xff]
    %v87 = vld [vmem:[#allocation5 + $0x30] sm:$0xff]
    %v88 = vld [vmem:[#allocation5 + $0x38] sm:$0xff]
    %v89 = vld [vmem:[#allocation5 + $0x40] sm:$0xff]
    %v90 = vld [vmem:[#allocation5 + $0x48] sm:$0xff]
    %v91 = vld [vmem:[#allocation5 + $0x50] sm:$0xff]
    %v92 = vld [vmem:[#allocation5 + $0x58] sm:$0xff]
    %v93 = vld [vmem:[#allocation5 + $0x60] sm:$0xff]
    %v94 = vld [vmem:[#allocation5 + $0x68] sm:$0xff]
    %v95 = vld [vmem:[#allocation5 + $0x70] sm:$0xff]
    %v96 = vld [vmem:[#allocation5 + $0x78] sm:$0xff]
    %v97 = vld [vmem:[%s2] sm:$0x1]
    %v99 = vperm.slane %v97, 0
    %101 = vmatpush.msra.mxu0 %v96
    %102 = vmatpush.msra.mxu0 %v95
    %103 = vmatpush.msra.mxu0 %v94
    %104 = vmatpush.msra.mxu0 %v93
    %105 = vmatpush.msra.mxu0 %v92
    %106 = vmatpush.msra.mxu0 %v91
    %107 = vmatpush.msra.mxu0 %v90
    %108 = vmatpush.msra.mxu0 %v89
    %109 = vmatpush.msra.mxu0 %v88
    %110 = vmatpush.msra.mxu0 %v87
    %111 = vmatpush.msra.mxu0 %v86
    %112 = vmatpush.msra.mxu0 %v85
    %113 = vmatpush.msra.mxu0 %v84
    %114 = vmatpush.msra.mxu0 %v83
    %115 = vmatpush.msra.mxu0 %v82
    %116 = vmatpush.msra.mxu0 %v81
    %117 = vmatmul.f32.gmra.mxu0 %v80
    %v118 = vpop.f32.mrf.mxu0
    %v119 = vadd.f32 %v99, %v118
    %120 = vdwg.mxu0
    %v121 = vmax.f32 %v119, 0.0
    %v122 = vld [vmem:[#allocation7] sm:$0xff]
    %v123 = vld [vmem:[#allocation7 + $0x8] sm:$0xff]
    %v124 = vld [vmem:[#allocation7 + $0x10] sm:$0xff]
    %v125 = vld [vmem:[#allocation7 + $0x18] sm:$0xff]
    %v126 = vld [vmem:[#allocation7 + $0x20] sm:$0xff]
    %v127 = vld [vmem:[#allocation7 + $0x28] sm:$0xff]
    %v128 = vld [vmem:[#allocation7 + $0x30] sm:$0xff]
    %v129 = vld [vmem:[#allocation7 + $0x38] sm:$0xff]
    %v130 = vld [vmem:[#allocation7 + $0x40] sm:$0xff]
    %v131 = vld [vmem:[#allocation7 + $0x48] sm:$0xff]
    %v132 = vld [vmem:[#allocation7 + $0x50] sm:$0xff]
    %v133 = vld [vmem:[#allocation7 + $0x58] sm:$0xff]
    %v134 = vld [vmem:[#allocation7 + $0x60] sm:$0xff]
    %v135 = vld [vmem:[#allocation7 + $0x68] sm:$0xff]
    %v136 = vld [vmem:[#allocation7 + $0x70] sm:$0xff]
    %v137 = vld [vmem:[#allocation7 + $0x78] sm:$0xff]
    %v138 = vld [vmem:[#allocation7 + $0x80] sm:$0xff]
    %v139 = vld [vmem:[#allocation7 + $0x88] sm:$0xff]
    %v140 = vld [vmem:[#allocation7 + $0x90] sm:$0xff]
    %v141 = vld [vmem:[#allocation7 + $0x98] sm:$0xff]
    %v142 = vld [vmem:[#allocation7 + $0xa0] sm:$0xff]
    %v143 = vld [vmem:[#allocation7 + $0xa8] sm:$0xff]
    %v144 = vld [vmem:[#allocation7 + $0xb0] sm:$0xff]
    %v145 = vld [vmem:[#allocation7 + $0xb8] sm:$0xff]
    %v146 = vld [vmem:[#allocation7 + $0xc0] sm:$0xff]
    %v147 = vld [vmem:[#allocation7 + $0xc8] sm:$0xff]
    %v148 = vld [vmem:[#allocation7 + $0xd0] sm:$0xff]
    %v149 = vld [vmem:[#allocation7 + $0xd8] sm:$0xff]
    %v150 = vld [vmem:[#allocation7 + $0xe0] sm:$0xff]
    %v151 = vld [vmem:[#allocation7 + $0xe8] sm:$0xff]
    %v152 = vld [vmem:[#allocation7 + $0xf0] sm:$0xff]
    %v153 = vld [vmem:[#allocation7 + $0xf8] sm:$0xff]
    %v154 = vld [vmem:[#allocation7 + $0x100] sm:$0xff]
    %v155 = vld [vmem:[#allocation7 + $0x108] sm:$0xff]
    %v156 = vld [vmem:[#allocation7 + $0x110] sm:$0xff]
    %v157 = vld [vmem:[#allocation7 + $0x118] sm:$0xff]
    %v158 = vld [vmem:[#allocation7 + $0x120] sm:$0xff]
    %v159 = vld [vmem:[#allocation7 + $0x128] sm:$0xff]
    %v160 = vld [vmem:[#allocation7 + $0x130] sm:$0xff]
    %v161 = vld [vmem:[#allocation7 + $0x138] sm:$0xff]
    %v162 = vld [vmem:[#allocation7 + $0x140] sm:$0xff]
    %v163 = vld [vmem:[#allocation7 + $0x148] sm:$0xff]
    %v164 = vld [vmem:[#allocation7 + $0x150] sm:$0xff]
    %v165 = vld [vmem:[#allocation7 + $0x158] sm:$0xff]
    %v166 = vld [vmem:[#allocation7 + $0x160] sm:$0xff]
    %v167 = vld [vmem:[#allocation7 + $0x168] sm:$0xff]
    %v168 = vld [vmem:[#allocation7 + $0x170] sm:$0xff]
    %v169 = vld [vmem:[#allocation7 + $0x178] sm:$0xff]
    %v170 = vld [vmem:[#allocation7 + $0x180] sm:$0xff]
    %v171 = vld [vmem:[#allocation7 + $0x188] sm:$0xff]
    %v172 = vld [vmem:[#allocation7 + $0x190] sm:$0xff]
    %v173 = vld [vmem:[#allocation7 + $0x198] sm:$0xff]
    %v174 = vld [vmem:[#allocation7 + $0x1a0] sm:$0xff]
    %v175 = vld [vmem:[#allocation7 + $0x1a8] sm:$0xff]
    %v176 = vld [vmem:[#allocation7 + $0x1b0] sm:$0xff]
    %v177 = vld [vmem:[#allocation7 + $0x1b8] sm:$0xff]
    %v178 = vld [vmem:[#allocation7 + $0x1c0] sm:$0xff]
    %v179 = vld [vmem:[#allocation7 + $0x1c8] sm:$0xff]
    %v180 = vld [vmem:[#allocation7 + $0x1d0] sm:$0xff]
    %v181 = vld [vmem:[#allocation7 + $0x1d8] sm:$0xff]
    %v182 = vld [vmem:[#allocation7 + $0x1e0] sm:$0xff]
    %v183 = vld [vmem:[#allocation7 + $0x1e8] sm:$0xff]
    %v184 = vld [vmem:[#allocation7 + $0x1f0] sm:$0xff]
    %v185 = vld [vmem:[#allocation7 + $0x1f8] sm:$0xff]
    %v186 = vld [vmem:[#allocation7 + $0x200] sm:$0xff]
    %v187 = vld [vmem:[#allocation7 + $0x208] sm:$0xff]
    %v188 = vld [vmem:[#allocation7 + $0x210] sm:$0xff]
    %v189 = vld [vmem:[#allocation7 + $0x218] sm:$0xff]
    %v190 = vld [vmem:[#allocation7 + $0x220] sm:$0xff]
    %v191 = vld [vmem:[#allocation7 + $0x228] sm:$0xff]
    %v192 = vld [vmem:[#allocation7 + $0x230] sm:$0xff]
    %v193 = vld [vmem:[#allocation7 + $0x238] sm:$0xff]
    %v194 = vld [vmem:[#allocation7 + $0x240] sm:$0xff]
    %v195 = vld [vmem:[#allocation7 + $0x248] sm:$0xff]
    %v196 = vld [vmem:[#allocation7 + $0x250] sm:$0xff]
    %v197 = vld [vmem:[#allocation7 + $0x258] sm:$0xff]
    %v198 = vld [vmem:[#allocation7 + $0x260] sm:$0xff]
    %v199 = vld [vmem:[#allocation7 + $0x268] sm:$0xff]
    %v200 = vld [vmem:[#allocation7 + $0x270] sm:$0xff]
    %v201 = vld [vmem:[#allocation7 + $0x278] sm:$0xff]
    %v202 = vld [vmem:[#allocation7 + $0x280] sm:$0xff]
    %v203 = vld [vmem:[#allocation7 + $0x288] sm:$0xff]
    %v204 = vld [vmem:[#allocation7 + $0x290] sm:$0xff]
    %v205 = vld [vmem:[#allocation7 + $0x298] sm:$0xff]
    %v206 = vld [vmem:[#allocation7 + $0x2a0] sm:$0xff]
    %v207 = vld [vmem:[#allocation7 + $0x2a8] sm:$0xff]
    %v208 = vld [vmem:[#allocation7 + $0x2b0] sm:$0xff]
    %v209 = vld [vmem:[#allocation7 + $0x2b8] sm:$0xff]
    %v210 = vld [vmem:[#allocation7 + $0x2c0] sm:$0xff]
    %v211 = vld [vmem:[#allocation7 + $0x2c8] sm:$0xff]
    %v212 = vld [vmem:[#allocation7 + $0x2d0] sm:$0xff]
    %v213 = vld [vmem:[#allocation7 + $0x2d8] sm:$0xff]
    %v214 = vld [vmem:[#allocation7 + $0x2e0] sm:$0xff]
    %v215 = vld [vmem:[#allocation7 + $0x2e8] sm:$0xff]
    %v216 = vld [vmem:[#allocation7 + $0x2f0] sm:$0xff]
    %v217 = vld [vmem:[#allocation7 + $0x2f8] sm:$0xff]
    %v218 = vld [vmem:[#allocation7 + $0x300] sm:$0xff]
    %v219 = vld [vmem:[#allocation7 + $0x308] sm:$0xff]
    %v220 = vld [vmem:[#allocation7 + $0x310] sm:$0xff]
    %v221 = vld [vmem:[#allocation7 + $0x318] sm:$0xff]
    %v222 = vld [vmem:[#allocation7 + $0x320] sm:$0xff]
    %v223 = vld [vmem:[#allocation7 + $0x328] sm:$0xff]
    %v224 = vld [vmem:[#allocation7 + $0x330] sm:$0xff]
    %v225 = vld [vmem:[#allocation7 + $0x338] sm:$0xff]
    %v226 = vld [vmem:[#allocation7 + $0x340] sm:$0xff]
    %v227 = vld [vmem:[#allocation7 + $0x348] sm:$0xff]
    %v228 = vld [vmem:[#allocation7 + $0x350] sm:$0xff]
    %v229 = vld [vmem:[#allocation7 + $0x358] sm:$0xff]
    %v230 = vld [vmem:[#allocation7 + $0x360] sm:$0xff]
    %v231 = vld [vmem:[#allocation7 + $0x368] sm:$0xff]
    %v232 = vld [vmem:[#allocation7 + $0x370] sm:$0xff]
    %v233 = vld [vmem:[#allocation7 + $0x378] sm:$0xff]
    %v234 = vld [vmem:[#allocation8] sm:$0xff]
    %v236 = vperm.slane %v234, 0
    %v237 = vperm.slane %v234, 1
    %v238 = vperm.slane %v234, 2
    %v239 = vperm.slane %v234, 3
    %v240 = vperm.slane %v234, 4
    %v241 = vperm.slane %v234, 5
    %v242 = vperm.slane %v234, 6
    %250 = vmatpush.msra.mxu0 %v227
    %251 = vmatpush.msra.mxu0 %v220
    %252 = vmatpush.msra.mxu0 %v213
    %253 = vmatpush.msra.mxu0 %v206
    %254 = vmatpush.msra.mxu0 %v199
    %255 = vmatpush.msra.mxu0 %v192
    %256 = vmatpush.msra.mxu0 %v185
    %257 = vmatpush.msra.mxu0 %v178
    %258 = vmatpush.msra.mxu0 %v171
    %259 = vmatpush.msra.mxu0 %v164
    %260 = vmatpush.msra.mxu0 %v157
    %261 = vmatpush.msra.mxu0 %v150
    %262 = vmatpush.msra.mxu0 %v143
    %263 = vmatpush.msra.mxu0 %v136
    %264 = vmatpush.msra.mxu0 %v129
    %265 = vmatpush.msra.mxu0 %v122
    %266 = vmatmul.f32.gmra.mxu0 %v121
    %v267 = vpop.f32.mrf.mxu0
    %v268 = vadd.f32 %v236, %v267
    %269 = vdwg.mxu0
    %270 = vmatpush.msra.mxu0 %v228
    %271 = vmatpush.msra.mxu0 %v221
    %272 = vmatpush.msra.mxu0 %v214
    %273 = vmatpush.msra.mxu0 %v207
    %274 = vmatpush.msra.mxu0 %v200
    %275 = vmatpush.msra.mxu0 %v193
    %276 = vmatpush.msra.mxu0 %v186
    %277 = vmatpush.msra.mxu0 %v179
    %278 = vmatpush.msra.mxu0 %v172
    %279 = vmatpush.msra.mxu0 %v165
    %280 = vmatpush.msra.mxu0 %v158
    %281 = vmatpush.msra.mxu0 %v151
    %282 = vmatpush.msra.mxu0 %v144
    %283 = vmatpush.msra.mxu0 %v137
    %284 = vmatpush.msra.mxu0 %v130
    %285 = vmatpush.msra.mxu0 %v123
    %286 = vmatmul.f32.gmra.mxu0 %v121
    %v287 = vpop.f32.mrf.mxu0
    %v288 = vadd.f32 %v237, %v287
    %289 = vdwg.mxu0
    %290 = vmatpush.msra.mxu0 %v229
    %291 = vmatpush.msra.mxu0 %v222
    %292 = vmatpush.msra.mxu0 %v215
    %293 = vmatpush.msra.mxu0 %v208
    %294 = vmatpush.msra.mxu0 %v201
    %295 = vmatpush.msra.mxu0 %v194
    %296 = vmatpush.msra.mxu0 %v187
    %297 = vmatpush.msra.mxu0 %v180
    %298 = vmatpush.msra.mxu0 %v173
    %299 = vmatpush.msra.mxu0 %v166
    %300 = vmatpush.msra.mxu0 %v159
    %301 = vmatpush.msra.mxu0 %v152
    %302 = vmatpush.msra.mxu0 %v145
    %303 = vmatpush.msra.mxu0 %v138
    %304 = vmatpush.msra.mxu0 %v131
    %305 = vmatpush.msra.mxu0 %v124
    %306 = vmatmul.f32.gmra.mxu0 %v121
    %v307 = vpop.f32.mrf.mxu0
    %v308 = vadd.f32 %v238, %v307
    %309 = vdwg.mxu0
    %310 = vmatpush.msra.mxu0 %v230
    %311 = vmatpush.msra.mxu0 %v223
    %312 = vmatpush.msra.mxu0 %v216
    %313 = vmatpush.msra.mxu0 %v209
    %314 = vmatpush.msra.mxu0 %v202
    %315 = vmatpush.msra.mxu0 %v195
    %316 = vmatpush.msra.mxu0 %v188
    %317 = vmatpush.msra.mxu0 %v181
    %318 = vmatpush.msra.mxu0 %v174
    %319 = vmatpush.msra.mxu0 %v167
    %320 = vmatpush.msra.mxu0 %v160
    %321 = vmatpush.msra.mxu0 %v153
    %322 = vmatpush.msra.mxu0 %v146
    %323 = vmatpush.msra.mxu0 %v139
    %324 = vmatpush.msra.mxu0 %v132
    %325 = vmatpush.msra.mxu0 %v125
    %326 = vmatmul.f32.gmra.mxu0 %v121
    %v327 = vpop.f32.mrf.mxu0
    %v328 = vadd.f32 %v239, %v327
    %329 = vdwg.mxu0
    %330 = vmatpush.msra.mxu0 %v231
    %331 = vmatpush.msra.mxu0 %v224
    %332 = vmatpush.msra.mxu0 %v217
    %333 = vmatpush.msra.mxu0 %v210
    %334 = vmatpush.msra.mxu0 %v203
    %335 = vmatpush.msra.mxu0 %v196
    %336 = vmatpush.msra.mxu0 %v189
    %337 = vmatpush.msra.mxu0 %v182
    %338 = vmatpush.msra.mxu0 %v175
    %339 = vmatpush.msra.mxu0 %v168
    %340 = vmatpush.msra.mxu0 %v161
    %341 = vmatpush.msra.mxu0 %v154
    %342 = vmatpush.msra.mxu0 %v147
    %343 = vmatpush.msra.mxu0 %v140
    %344 = vmatpush.msra.mxu0 %v133
    %345 = vmatpush.msra.mxu0 %v126
    %346 = vmatmul.f32.gmra.mxu0 %v121
    %v347 = vpop.f32.mrf.mxu0
    %v348 = vadd.f32 %v240, %v347
    %349 = vdwg.mxu0
    %350 = vmatpush.msra.mxu0 %v232
    %351 = vmatpush.msra.mxu0 %v225
    %352 = vmatpush.msra.mxu0 %v218
    %353 = vmatpush.msra.mxu0 %v211
    %354 = vmatpush.msra.mxu0 %v204
    %355 = vmatpush.msra.mxu0 %v197
    %356 = vmatpush.msra.mxu0 %v190
    %357 = vmatpush.msra.mxu0 %v183
    %358 = vmatpush.msra.mxu0 %v176
    %359 = vmatpush.msra.mxu0 %v169
    %360 = vmatpush.msra.mxu0 %v162
    %361 = vmatpush.msra.mxu0 %v155
    %362 = vmatpush.msra.mxu0 %v148
    %363 = vmatpush.msra.mxu0 %v141
    %364 = vmatpush.msra.mxu0 %v134
    %365 = vmatpush.msra.mxu0 %v127
    %366 = vmatmul.f32.gmra.mxu0 %v121
    %v367 = vpop.f32.mrf.mxu0
    %v368 = vadd.f32 %v241, %v367
    %369 = vdwg.mxu0
    %370 = vmatpush.msra.mxu0 %v233
    %371 = vmatpush.msra.mxu0 %v226
    %372 = vmatpush.msra.mxu0 %v219
    %373 = vmatpush.msra.mxu0 %v212
    %374 = vmatpush.msra.mxu0 %v205
    %375 = vmatpush.msra.mxu0 %v198
    %376 = vmatpush.msra.mxu0 %v191
    %377 = vmatpush.msra.mxu0 %v184
    %378 = vmatpush.msra.mxu0 %v177
    %379 = vmatpush.msra.mxu0 %v170
    %380 = vmatpush.msra.mxu0 %v163
    %381 = vmatpush.msra.mxu0 %v156
    %382 = vmatpush.msra.mxu0 %v149
    %383 = vmatpush.msra.mxu0 %v142
    %384 = vmatpush.msra.mxu0 %v135
    %385 = vmatpush.msra.mxu0 %v128
    %386 = vmatmul.f32.gmra.mxu0 %v121
    %v387 = vpop.f32.mrf.mxu0
    %v388 = vadd.f32 %v242, %v387
    %389 = vdwg.mxu0
    %v390 = vsub.f32 0.0, %v268
    %v391 = vsub.f32 0.0, %v288
    %v392 = vsub.f32 0.0, %v308
    %v393 = vsub.f32 0.0, %v328
    %v394 = vsub.f32 0.0, %v348
    %v395 = vsub.f32 0.0, %v368
    %v396 = vsub.f32 0.0, %v388
    %v397 = vmul.f32 %v390, 1.442695
    %v398 = vpow.pop %v397
    %v399 = vmul.f32 %v391, 1.442695
    %v400 = vpow.pop %v399
    %v401 = vmul.f32 %v392, 1.442695
    %v402 = vpow.pop %v401
    %v403 = vmul.f32 %v393, 1.442695
    %v404 = vpow.pop %v403
    %v405 = vmul.f32 %v394, 1.442695
    %v406 = vpow.pop %v405
    %v407 = vmul.f32 %v395, 1.442695
    %v408 = vpow.pop %v407
    %v409 = vmul.f32 %v396, 1.442695
    %v410 = vpow.pop %v409
    %v411 = vadd.f32 %v398, 1.0
    %v412 = vadd.f32 %v400, 1.0
    %v413 = vadd.f32 %v402, 1.0
    %v414 = vadd.f32 %v404, 1.0
    %v415 = vadd.f32 %v406, 1.0
    %v416 = vadd.f32 %v408, 1.0
    %v417 = vadd.f32 %v410, 1.0
    %v418 = vrcp.pop %v411
    %v419 = vmul.f32 %v411, %v418
    %v420 = vsub.f32 1.0, %v419
    %v421 = vmul.f32 %v418, %v420
    %v422 = vadd.f32 %v418, %v421
    %vm423 = vweird.f32 %v411
    %vm424 = vweird.f32 %v418
    %vm425 = vmor %vm423, %vm424
    %v426 = vsel %vm425, %v418, %v422
    %v427 = vand.u32 2147483647, %v411
    %vm428 = vcmp.eq.f32.partialorder %v427, 8.507059e+37
    %v429 = vand.u32 %v411, 2147483648
    %v430 = vor.u32 1.1754944e-38, %v429
    %v431 = vsel %vm428, %v430, %v426
    %v432 = vmul.f32 1.0, %v431
    %v433 = vrcp.pop %v412
    %v434 = vmul.f32 %v412, %v433
    %v435 = vsub.f32 1.0, %v434
    %v436 = vmul.f32 %v433, %v435
    %v437 = vadd.f32 %v433, %v436
    %vm438 = vweird.f32 %v412
    %vm439 = vweird.f32 %v433
    %vm440 = vmor %vm438, %vm439
    %v441 = vsel %vm440, %v433, %v437
    %v442 = vand.u32 2147483647, %v412
    %vm443 = vcmp.eq.f32.partialorder %v442, 8.507059e+37
    %v444 = vand.u32 %v412, 2147483648
    %v445 = vor.u32 1.1754944e-38, %v444
    %v446 = vsel %vm443, %v445, %v441
    %v447 = vmul.f32 1.0, %v446
    %v448 = vrcp.pop %v413
    %v449 = vmul.f32 %v413, %v448
    %v450 = vsub.f32 1.0, %v449
    %v451 = vmul.f32 %v448, %v450
    %v452 = vadd.f32 %v448, %v451
    %vm453 = vweird.f32 %v413
    %vm454 = vweird.f32 %v448
    %vm455 = vmor %vm453, %vm454
    %v456 = vsel %vm455, %v448, %v452
    %v457 = vand.u32 2147483647, %v413
    %vm458 = vcmp.eq.f32.partialorder %v457, 8.507059e+37
    %v459 = vand.u32 %v413, 2147483648
    %v460 = vor.u32 1.1754944e-38, %v459
    %v461 = vsel %vm458, %v460, %v456
    %v462 = vmul.f32 1.0, %v461
    %v463 = vrcp.pop %v414
    %v464 = vmul.f32 %v414, %v463
    %v465 = vsub.f32 1.0, %v464
    %v466 = vmul.f32 %v463, %v465
    %v467 = vadd.f32 %v463, %v466
    %vm468 = vweird.f32 %v414
    %vm469 = vweird.f32 %v463
    %vm470 = vmor %vm468, %vm469
    %v471 = vsel %vm470, %v463, %v467
    %v472 = vand.u32 2147483647, %v414
    %vm473 = vcmp.eq.f32.partialorder %v472, 8.507059e+37
    %v474 = vand.u32 %v414, 2147483648
    %v475 = vor.u32 1.1754944e-38, %v474
    %v476 = vsel %vm473, %v475, %v471
    %v477 = vmul.f32 1.0, %v476
    %v478 = vrcp.pop %v415
    %v479 = vmul.f32 %v415, %v478
    %v480 = vsub.f32 1.0, %v479
    %v481 = vmul.f32 %v478, %v480
    %v482 = vadd.f32 %v478, %v481
    %vm483 = vweird.f32 %v415
    %vm484 = vweird.f32 %v478
    %vm485 = vmor %vm483, %vm484
    %v486 = vsel %vm485, %v478, %v482
    %v487 = vand.u32 2147483647, %v415
    %vm488 = vcmp.eq.f32.partialorder %v487, 8.507059e+37
    %v489 = vand.u32 %v415, 2147483648
    %v490 = vor.u32 1.1754944e-38, %v489
    %v491 = vsel %vm488, %v490, %v486
    %v492 = vmul.f32 1.0, %v491
    %v493 = vrcp.pop %v416
    %v494 = vmul.f32 %v416, %v493
    %v495 = vsub.f32 1.0, %v494
    %v496 = vmul.f32 %v493, %v495
    %v497 = vadd.f32 %v493, %v496
    %vm498 = vweird.f32 %v416
    %vm499 = vweird.f32 %v493
    %vm500 = vmor %vm498, %vm499
    %v501 = vsel %vm500, %v493, %v497
    %v502 = vand.u32 2147483647, %v416
    %vm503 = vcmp.eq.f32.partialorder %v502, 8.507059e+37
    %v504 = vand.u32 %v416, 2147483648
    %v505 = vor.u32 1.1754944e-38, %v504
    %v506 = vsel %vm503, %v505, %v501
    %v507 = vmul.f32 1.0, %v506
    %v508 = vrcp.pop %v417
    %v509 = vmul.f32 %v417, %v508
    %v510 = vsub.f32 1.0, %v509
    %v511 = vmul.f32 %v508, %v510
    %v512 = vadd.f32 %v508, %v511
    %vm513 = vweird.f32 %v417
    %vm514 = vweird.f32 %v508
    %vm515 = vmor %vm513, %vm514
    %v516 = vsel %vm515, %v508, %v512
    %v517 = vand.u32 2147483647, %v417
    %vm518 = vcmp.eq.f32.partialorder %v517, 8.507059e+37
    %v519 = vand.u32 %v417, 2147483648
    %v520 = vor.u32 1.1754944e-38, %v519
    %v521 = vsel %vm518, %v520, %v516
    %v522 = vmul.f32 1.0, %v521
    %523 = vst [vmem:[#allocation10] sm:$0xff] %v432
    %524 = vst [vmem:[#allocation10 + $0x8] sm:$0xff] %v447
    %525 = vst [vmem:[#allocation10 + $0x10] sm:$0xff] %v462
    %526 = vst [vmem:[#allocation10 + $0x18] sm:$0xff] %v477
    %527 = vst [vmem:[#allocation10 + $0x20] sm:$0xff] %v492
    %528 = vst [vmem:[#allocation10 + $0x28] sm:$0xff] %v507
    %529 = vst [vmem:[#allocation10 + $0x30] sm:$0xff] %v522
    // Predicated region
    $region38: #{tpu_custom_call.1} parent=1 // pred_check
      _
    $region39: #{tpu_custom_call.1} parent=1 // pred_check_branch
      %531 = sbr.rel (0) target = $region41
    $region40: #{tpu_custom_call.1} parent=1 // pred_region
      %533 = vsyncadd [#allocation4], 0
      %s535 = sshll.u32 [#allocation10], 4
      %s536 = int_to_ptr.vmem [resolvable:$true] %s535
      %s537 = sshll.u32 %s5, 4
      %s538 = int_to_ptr.hbm [resolvable:$true] %s537
      %540 = dma.vmem_to_hbm [thread:$0]  %s536, 896, %s538, [#allocation4]
    $region41: #{tpu_custom_call.1} parent=1 // pred_fallthru
      _
    // Predicated region
    $region42: #{tpu_custom_call.1} parent=1 // pred_check
      _
    $region43: #{tpu_custom_call.1} parent=1 // pred_check_branch
      %542 = sbr.rel (0) target = $region45
    $region44: #{tpu_custom_call.1} parent=1 // pred_region
      %544 = dma.done [#allocation4], 896
    $region45: #{tpu_custom_call.1} parent=1 // pred_fallthru
      _
    %545 = vsyncpa [#allocation3], 1
    %546 = vsyncpa [#allocation6], 1
    %547 = vsyncpa [#allocation9], 1
    %548 = vsyncpa [#allocation4], 1

</llo_original>
